<compile_context>
chip_gen: v7x
topology: tpu7x:2x2x1
jax: 0.10.0
libtpu: 0.0.40
codegen_flags: <defaults>
</compile_context>

<pallas_src>
import functools

import jax
import jax.numpy as jnp
from jax.experimental import pallas as pl
from jax.experimental.pallas import tpu as pltpu

_MIB = 1024 * 1024


def _round_up(x, m):
    return (x + m - 1) // m * m


def _pad2(x, rows, cols):
    r, c = x.shape
    return jnp.pad(x, ((0, rows - r), (0, cols - c)))


def _vmem_capacity_bytes():
    """Physical VMEM of the attached TPU generation (64 MiB v7x, 128 MiB v5e/v6e)."""
    try:
        info = pltpu.get_tpu_info()
        for attr in ("vmem_capacity_bytes", "vmem_bytes", "vmem_size_bytes"):
            v = getattr(info, attr, None)
            if v:
                return int(v)
    except Exception:
        pass
    return 64 * _MIB  # conservative default (v7x-sized)


def _clamp_vmem(request_bytes, capacity):
    return int(min(max(request_bytes, 32 * _MIB), int(0.85 * capacity)))


def _pick_tile(n_p, cap):
    """Largest multiple of 128 that is <= cap and divides n_p (n_p % 128 == 0)."""
    best = 128
    t = 128
    while t <= min(cap, n_p):
        if n_p % t == 0:
            best = t
        t += 128
    return best


def _fusion_footprint_bytes(n_p, in_p, hid_p, out_p, a_itemsize):
    return (n_p * n_p * a_itemsize                      # resident A
            + n_p * in_p * 4                            # X
            + in_p * hid_p * 4 + hid_p * out_p * 4      # W1, W2
            + (hid_p + out_p) * 4                       # biases
            + n_p * hid_p * 4 * 3                       # emb / relu / xw1 temps
            + n_p * out_p * 4 * 2)                      # out / xw2 temps


# ---------------------------------------------------------------------------
# Feature transform kernel (hoisted out of the A contraction):
#   XW[i-block] = maybe_relu(X[i-block]) @ W
# ---------------------------------------------------------------------------
def _xw_kernel(x_ref, w_ref, xw_ref, *, apply_relu, matmul_dtype):
    x = x_ref[...]
    if apply_relu:
        x = jnp.maximum(x, 0.0)          # f32 ReLU on the VPU (no bf16 VALU on v5e)
    xw_ref[...] = jnp.dot(
        x.astype(matmul_dtype), w_ref[...].astype(matmul_dtype),
        preferred_element_type=jnp.float32).astype(xw_ref.dtype)


def _feature_transform(x_p, w_p, *, apply_relu, matmul_dtype, capacity):
    n_p, f_in = x_p.shape
    f_out = w_p.shape[1]
    tr = _pick_tile(n_p, 512)
    footprint = (2 * tr * f_in * 4
                 + 2 * f_in * f_out * 4
                 + 2 * tr * f_out * jnp.dtype(matmul_dtype).itemsize)
    kernel = functools.partial(_xw_kernel, apply_relu=apply_relu,
                               matmul_dtype=matmul_dtype)
    return pl.pallas_call(
        kernel,
        out_shape=jax.ShapeDtypeStruct((n_p, f_out), matmul_dtype),
        grid_spec=pltpu.PrefetchScalarGridSpec(
            num_scalar_prefetch=0,
            grid=(n_p // tr,),
            in_specs=[
                pl.BlockSpec((tr, f_in), lambda i: (i, 0)),      # X row tile
                pl.BlockSpec((f_in, f_out), lambda i: (0, 0)),   # W (resident)
            ],
            out_specs=pl.BlockSpec((tr, f_out), lambda i: (i, 0)),
        ),
        compiler_params=pltpu.CompilerParams(
            dimension_semantics=("parallel",),
            vmem_limit_bytes=_clamp_vmem(footprint + 8 * _MIB, capacity),
        ),
    )(x_p, w_p)


# ---------------------------------------------------------------------------
# Aggregation kernel (A-bandwidth-bound stream):
#   out[i-block] = A[i-block, :] @ XW + b
# Grid = (row blocks : "parallel", A-contraction blocks : "arbitrary").
# ---------------------------------------------------------------------------
def _agg_kernel(a_ref, xw_ref, b_ref, out_ref, acc_ref):
    k = pl.program_id(1)

    @pl.when(k == 0)
    def _():
        # Bias folded into the accumulator init (no extra add at finalize).
        acc_ref[...] = jnp.broadcast_to(b_ref[...], acc_ref.shape)

    acc_ref[...] += jnp.dot(a_ref[...], xw_ref[...],
                            preferred_element_type=jnp.float32)

    @pl.when(k == pl.num_programs(1) - 1)
    def _():
        out_ref[...] = acc_ref[...]


def _aggregate(a_p, xw_p, b_p, *, tm, tk, capacity):
    n_p = a_p.shape[0]
    f_out = xw_p.shape[1]
    assert n_p % tm == 0 and n_p % tk == 0, (n_p, tm, tk)
    footprint = (2 * tm * tk * a_p.dtype.itemsize        # A tile, double-buffered
                 + 2 * tk * f_out * xw_p.dtype.itemsize  # XW tile, double-buffered
                 + 2 * tm * f_out * 4                    # out tile, double-buffered
                 + tm * f_out * 4                        # f32 accumulator
                 + 2 * f_out * 4)                        # bias
    return pl.pallas_call(
        _agg_kernel,
        out_shape=jax.ShapeDtypeStruct((n_p, f_out), jnp.float32),
        grid_spec=pltpu.PrefetchScalarGridSpec(
            num_scalar_prefetch=0,
            grid=(n_p // tm, n_p // tk),
            in_specs=[
                pl.BlockSpec((tm, tk), lambda i, k: (i, k)),     # A row/col tile
                pl.BlockSpec((tk, f_out), lambda i, k: (k, 0)),  # XW contraction tile
                pl.BlockSpec((1, f_out), lambda i, k: (0, 0)),   # bias (resident)
            ],
            out_specs=pl.BlockSpec((tm, f_out), lambda i, k: (i, 0)),
            scratch_shapes=[pltpu.VMEM((tm, f_out), jnp.float32)],
        ),
        compiler_params=pltpu.CompilerParams(
            dimension_semantics=("parallel", "arbitrary"),
            vmem_limit_bytes=_clamp_vmem(footprint + 8 * _MIB, capacity),
        ),
    )(a_p, xw_p, b_p)


# ---------------------------------------------------------------------------
# Fused small-graph kernel: A stays resident in VMEM across both layers
# (A read from HBM once; emb never round-trips through HBM).
# ---------------------------------------------------------------------------
def _fused_kernel(a_ref, x_ref, w1_ref, b1_ref, w2_ref, b2_ref,
                  out_ref, emb_ref, *, matmul_dtype):
    a = a_ref[...]
    xw1 = jnp.dot(x_ref[...].astype(matmul_dtype), w1_ref[...].astype(matmul_dtype),
                  preferred_element_type=jnp.float32)
    emb = jnp.dot(a, xw1.astype(matmul_dtype),
                  preferred_element_type=jnp.float32) + b1_ref[...]
    emb_ref[...] = emb
    r = jnp.maximum(emb, 0.0)                                # f32 ReLU on the VPU
    xw2 = jnp.dot(r.astype(matmul_dtype), w2_ref[...].astype(matmul_dtype),
                  preferred_element_type=jnp.float32)
    out_ref[...] = jnp.dot(a, xw2.astype(matmul_dtype),
                           preferred_element_type=jnp.float32) + b2_ref[...]


def _fused_forward(a_p, x_p, w1_p, b1_p, w2_p, b2_p, *, matmul_dtype, capacity):
    n_p, in_p = x_p.shape
    hid_p = w1_p.shape[1]
    out_p = w2_p.shape[1]
    footprint = _fusion_footprint_bytes(n_p, in_p, hid_p, out_p,
                                        a_p.dtype.itemsize)
    kernel = functools.partial(_fused_kernel, matmul_dtype=matmul_dtype)
    return pl.pallas_call(
        kernel,
        out_shape=(jax.ShapeDtypeStruct((n_p, out_p), jnp.float32),
                   jax.ShapeDtypeStruct((n_p, hid_p), jnp.float32)),
        grid_spec=pltpu.PrefetchScalarGridSpec(
            num_scalar_prefetch=0,
            grid=(1,),
            in_specs=[
                pl.BlockSpec((n_p, n_p), lambda i: (0, 0)),      # A (resident)
                pl.BlockSpec((n_p, in_p), lambda i: (0, 0)),     # X
                pl.BlockSpec((in_p, hid_p), lambda i: (0, 0)),   # W1
                pl.BlockSpec((1, hid_p), lambda i: (0, 0)),      # b1
                pl.BlockSpec((hid_p, out_p), lambda i: (0, 0)),  # W2
                pl.BlockSpec((1, out_p), lambda i: (0, 0)),      # b2
            ],
            out_specs=[
                pl.BlockSpec((n_p, out_p), lambda i: (0, 0)),
                pl.BlockSpec((n_p, hid_p), lambda i: (0, 0)),
            ],
        ),
        compiler_params=pltpu.CompilerParams(
            dimension_semantics=("arbitrary",),
            vmem_limit_bytes=_clamp_vmem(2 * footprint + 8 * _MIB, capacity),
        ),
    )(a_p, x_p, w1_p, b1_p, w2_p, b2_p)


def gcn2_forward(a_hat, x, w1, b1, w2, b2, *,
                 matmul_dtype=jnp.bfloat16, fuse="auto", tm=512, tk=1024):
    """Net.forward: returns (logits, x_emb)."""
    n, in_f = x.shape
    hid = w1.shape[1]
    out = w2.shape[1]
    capacity = _vmem_capacity_bytes()

    # Pad nodes to 128 (decoupled from tile size) and every feature dim to 128
    # so all MXU shapes are full tiles and all stores are lane-dense.
    n_p = _round_up(n, 128)
    in_p = _round_up(in_f, 128)
    hid_p = _round_up(hid, 128)
    out_p = _round_up(out, 128)

    a_p = _pad2(a_hat, n_p, n_p).astype(matmul_dtype)   # bf16 A: half HBM/VMEM traffic
    x_p = _pad2(x, n_p, in_p).astype(jnp.float32)
    w1_p = _pad2(w1.reshape(in_f, hid), in_p, hid_p).astype(jnp.float32)
    b1_p = _pad2(b1.reshape(1, -1), 1, hid_p).astype(jnp.float32)
    w2_p = _pad2(w2.reshape(hid, out), hid_p, out_p).astype(jnp.float32)
    b2_p = _pad2(b2.reshape(1, -1), 1, out_p).astype(jnp.float32)

    if fuse == "auto":
        footprint = _fusion_footprint_bytes(n_p, in_p, hid_p, out_p,
                                            jnp.dtype(matmul_dtype).itemsize)
        fuse = footprint <= 0.25 * capacity   # generation-aware VMEM gate

    if fuse:
        out_arr, emb_p = _fused_forward(a_p, x_p, w1_p, b1_p, w2_p, b2_p,
                                        matmul_dtype=matmul_dtype,
                                        capacity=capacity)
    else:
        # Streamed path: hoisted XW + A-bandwidth-bound aggregation per layer.
        tm_p = _pick_tile(n_p, tm)
        tk_p = _pick_tile(n_p, tk)
        if n_p // tm_p < 2 and tm_p >= 16:
            tm_p //= 2   # keep >=2 row blocks so both v7x TensorCores get work

        xw1 = _feature_transform(x_p, w1_p, apply_relu=False,
                                 matmul_dtype=matmul_dtype, capacity=capacity)
        emb_p = _aggregate(a_p, xw1, b1_p, tm=tm_p, tk=tk_p, capacity=capacity)
        xw2 = _feature_transform(emb_p, w2_p, apply_relu=True,
                                 matmul_dtype=matmul_dtype, capacity=capacity)
        out_arr = _aggregate(a_p, xw2, b2_p, tm=tm_p, tk=tk_p, capacity=capacity)

    return out_arr[:n, :out], emb_p[:n, :hid]


def build_normalized_adjacency(edge_index, edge_weight, num_nodes):
    """Dense GCN-normalized adjacency: A_hat[dst, src] = d_dst^-1/2 w d_src^-1/2,
    with self-loops (weight 1) added."""
    src, dst = edge_index[0], edge_index[1]
    loop = jnp.arange(num_nodes, dtype=src.dtype)
    src = jnp.concatenate([src, loop])
    dst = jnp.concatenate([dst, loop])
    w = jnp.concatenate([edge_weight, jnp.ones((num_nodes,), edge_weight.dtype)])

    deg = jnp.zeros((num_nodes,), jnp.float32).at[dst].add(w)
    deg_inv_sqrt = jnp.where(deg > 0, 1.0 / jnp.sqrt(deg), 0.0)
    norm = deg_inv_sqrt[src] * w * deg_inv_sqrt[dst]

    a_hat = jnp.zeros((num_nodes, num_nodes), jnp.float32)
    a_hat = a_hat.at[dst, src].add(norm)
    return a_hat


def reference_forward(a_hat, x, w1, b1, w2, b2):
    x_emb = a_hat @ (x @ w1) + b1
    r = jnp.maximum(x_emb, 0.0)
    out = a_hat @ (r @ w2) + b2
    return out, x_emb


if __name__ == "__main__":
    # Module sizes from Net.__init__: in_size=16, hid_size=8, out_size=2.
    N, IN, HID, OUT = 8, 16, 8, 2

    key = jax.random.PRNGKey(0)
    kx, kw1, kb1, kw2, kb2, kwgt = jax.random.split(key, 6)

    # Node features.
    x = jax.random.normal(kx, (N, IN), jnp.float32)

    # Deterministic small graph: bidirectional ring with random edge weights.
    src = jnp.arange(N, dtype=jnp.int32)
    dst = (src + 1) % N
    edge_index = jnp.stack(
        [jnp.concatenate([src, dst]), jnp.concatenate([dst, src])], axis=0
    )  # (2, 2N)
    edge_weight = jax.random.uniform(
        kwgt, (edge_index.shape[1],), jnp.float32, 0.5, 1.5
    )

    # Glorot-style weights + small random biases (GCNConv: weight + bias).
    w1 = jax.random.normal(kw1, (IN, HID), jnp.float32) * (1.0 / jnp.sqrt(IN))
    b1 = jax.random.normal(kb1, (HID,), jnp.float32) * 0.1
    w2 = jax.random.normal(kw2, (HID, OUT), jnp.float32) * (1.0 / jnp.sqrt(HID))
    b2 = jax.random.normal(kb2, (OUT,), jnp.float32) * 0.1

    a_hat = build_normalized_adjacency(edge_index, edge_weight, N)
    ref_out, ref_emb = reference_forward(a_hat, x, w1, b1, w2, b2)

    # Fused (A resident) path, f32 operands: exact-semantics check.
    out_f, emb_f = gcn2_forward(a_hat, x, w1, b1, w2, b2,
                                matmul_dtype=jnp.float32, fuse=True)
    jax.block_until_ready((out_f, emb_f))
    assert jnp.allclose(emb_f, ref_emb, atol=1e-5, rtol=1e-5)
    assert jnp.allclose(out_f, ref_out, atol=1e-5, rtol=1e-5)

    # Fused path, bf16 operands (f32 accumulation): looser tolerance.
    out_fb, emb_fb = gcn2_forward(a_hat, x, w1, b1, w2, b2,
                                  matmul_dtype=jnp.bfloat16, fuse=True)
    jax.block_until_ready((out_fb, emb_fb))
    assert jnp.allclose(emb_fb, ref_emb, atol=5e-2, rtol=5e-2)
    assert jnp.allclose(out_fb, ref_out, atol=5e-2, rtol=5e-2)

    # Streamed path (hoisted XW + A-streaming aggregation), f32: exact check.
    out_s, emb_s = gcn2_forward(a_hat, x, w1, b1, w2, b2,
                                matmul_dtype=jnp.float32, fuse=False)
    jax.block_until_ready((out_s, emb_s))
    assert jnp.allclose(emb_s, ref_emb, atol=1e-5, rtol=1e-5)
    assert jnp.allclose(out_s, ref_out, atol=1e-5, rtol=1e-5)

    # Streamed path, bf16 operands (default perf config).
    out_sb, emb_sb = gcn2_forward(a_hat, x, w1, b1, w2, b2,
                                  matmul_dtype=jnp.bfloat16, fuse=False)
    jax.block_until_ready((out_sb, emb_sb))
    assert jnp.allclose(emb_sb, ref_emb, atol=5e-2, rtol=5e-2)
    assert jnp.allclose(out_sb, ref_out, atol=5e-2, rtol=5e-2)

    print("KERNEL_OK")
</pallas_src>

<mosaic_0001>
module attributes {stable_mosaic.version = 11 : i64} {
  func.func @_fused_kernel(%arg0: i32, %arg1: memref<128x128xf32, #tpu.memory_space<vmem>>, %arg2: memref<128x128xf32, #tpu.memory_space<vmem>>, %arg3: memref<128x128xf32, #tpu.memory_space<vmem>>, %arg4: memref<1x128xf32, #tpu.memory_space<vmem>>, %arg5: memref<128x128xf32, #tpu.memory_space<vmem>>, %arg6: memref<1x128xf32, #tpu.memory_space<vmem>>, %arg7: memref<128x128xf32, #tpu.memory_space<vmem>>, %arg8: memref<128x128xf32, #tpu.memory_space<vmem>>) attributes {dimension_semantics = [#tpu.dimension_semantics<arbitrary>], iteration_bounds = array<i64: 1>, scalar_prefetch = 0 : i64, scratch_operands = 0 : i64, tpu.core_type = #tpu.core_type<tc>, window_params = [{pipeline_mode = #tpu.pipeline_mode<synchronous>, transform_indices = @transform_0, window_bounds = array<i64: 128, 128>}, {pipeline_mode = #tpu.pipeline_mode<synchronous>, transform_indices = @transform_1, window_bounds = array<i64: 128, 128>}, {pipeline_mode = #tpu.pipeline_mode<synchronous>, transform_indices = @transform_2, window_bounds = array<i64: 128, 128>}, {pipeline_mode = #tpu.pipeline_mode<synchronous>, transform_indices = @transform_3, window_bounds = array<i64: 1, 128>}, {pipeline_mode = #tpu.pipeline_mode<synchronous>, transform_indices = @transform_4, window_bounds = array<i64: 128, 128>}, {pipeline_mode = #tpu.pipeline_mode<synchronous>, transform_indices = @transform_5, window_bounds = array<i64: 1, 128>}, {pipeline_mode = #tpu.pipeline_mode<synchronous>, transform_indices = @transform_6, window_bounds = array<i64: 128, 128>}, {pipeline_mode = #tpu.pipeline_mode<synchronous>, transform_indices = @transform_7, window_bounds = array<i64: 128, 128>}]} {
    %c0 = arith.constant 0 : index
    %c0_0 = arith.constant 0 : index
    %0 = vector.load %arg1[%c0, %c0_0] : memref<128x128xf32, #tpu.memory_space<vmem>>, vector<128x128xf32>
    %c0_1 = arith.constant 0 : index
    %c0_2 = arith.constant 0 : index
    %1 = vector.load %arg2[%c0_1, %c0_2] : memref<128x128xf32, #tpu.memory_space<vmem>>, vector<128x128xf32>
    %c0_3 = arith.constant 0 : index
    %c0_4 = arith.constant 0 : index
    %2 = vector.load %arg3[%c0_3, %c0_4] : memref<128x128xf32, #tpu.memory_space<vmem>>, vector<128x128xf32>
    %cst = arith.constant dense<0.000000e+00> : vector<128x128xf32>
    %3 = tpu.matmul %1, %2, %cst {dimension_numbers = #tpu.dot_dimension_numbers<[1], [0], [0], [1], [0, 0, 1, 1], [], []>} : vector<128x128xf32>, vector<128x128xf32>, vector<128x128xf32> -> vector<128x128xf32>
    %cst_5 = arith.constant dense<0.000000e+00> : vector<128x128xf32>
    %4 = tpu.matmul %0, %3, %cst_5 {dimension_numbers = #tpu.dot_dimension_numbers<[1], [0], [0], [1], [0, 0, 1, 1], [], []>} : vector<128x128xf32>, vector<128x128xf32>, vector<128x128xf32> -> vector<128x128xf32>
    %c0_6 = arith.constant 0 : index
    %c0_7 = arith.constant 0 : index
    %5 = vector.load %arg4[%c0_6, %c0_7] : memref<1x128xf32, #tpu.memory_space<vmem>>, vector<1x128xf32>
    %6 = vector.broadcast %5 : vector<1x128xf32> to vector<128x128xf32>
    %7 = arith.addf %4, %6 : vector<128x128xf32>
    %c0_8 = arith.constant 0 : index
    %c0_9 = arith.constant 0 : index
    %8 = vector.load %arg8[%c0_8, %c0_9] : memref<128x128xf32, #tpu.memory_space<vmem>>, vector<128x128xf32>
    tpu.vector_store %arg8[%c0_8, %c0_9], %7 {strides = array<i32>} : memref<128x128xf32, #tpu.memory_space<vmem>>, vector<128x128xf32>,
    %cst_10 = arith.constant 0.000000e+00 : f32
    %9 = vector.broadcast %cst_10 : f32 to vector<128x128xf32>
    %10 = arith.maximumf %7, %9 : vector<128x128xf32>
    %c0_11 = arith.constant 0 : index
    %c0_12 = arith.constant 0 : index
    %11 = vector.load %arg5[%c0_11, %c0_12] : memref<128x128xf32, #tpu.memory_space<vmem>>, vector<128x128xf32>
    %cst_13 = arith.constant dense<0.000000e+00> : vector<128x128xf32>
    %12 = tpu.matmul %10, %11, %cst_13 {dimension_numbers = #tpu.dot_dimension_numbers<[1], [0], [0], [1], [0, 0, 1, 1], [], []>} : vector<128x128xf32>, vector<128x128xf32>, vector<128x128xf32> -> vector<128x128xf32>
    %cst_14 = arith.constant dense<0.000000e+00> : vector<128x128xf32>
    %13 = tpu.matmul %0, %12, %cst_14 {dimension_numbers = #tpu.dot_dimension_numbers<[1], [0], [0], [1], [0, 0, 1, 1], [], []>} : vector<128x128xf32>, vector<128x128xf32>, vector<128x128xf32> -> vector<128x128xf32>
    %c0_15 = arith.constant 0 : index
    %c0_16 = arith.constant 0 : index
    %14 = vector.load %arg6[%c0_15, %c0_16] : memref<1x128xf32, #tpu.memory_space<vmem>>, vector<1x128xf32>
    %15 = vector.broadcast %14 : vector<1x128xf32> to vector<128x128xf32>
    %16 = arith.addf %13, %15 : vector<128x128xf32>
    %c0_17 = arith.constant 0 : index
    %c0_18 = arith.constant 0 : index
    %17 = vector.load %arg7[%c0_17, %c0_18] : memref<128x128xf32, #tpu.memory_space<vmem>>, vector<128x128xf32>
    tpu.vector_store %arg7[%c0_17, %c0_18], %16 {strides = array<i32>} : memref<128x128xf32, #tpu.memory_space<vmem>>, vector<128x128xf32>,
    return
  }
  func.func @transform_0(%arg0: i32) -> (i32, i32) {
    %c0_i32 = arith.constant 0 : i32
    %c0_i32_0 = arith.constant 0 : i32
    %c0_i32_1 = arith.constant 0 : i32
    return %c0_i32, %c0_i32_0 : i32, i32
  }
  func.func @transform_1(%arg0: i32) -> (i32, i32) {
    %c0_i32 = arith.constant 0 : i32
    %c0_i32_0 = arith.constant 0 : i32
    %c0_i32_1 = arith.constant 0 : i32
    return %c0_i32, %c0_i32_0 : i32, i32
  }
  func.func @transform_2(%arg0: i32) -> (i32, i32) {
    %c0_i32 = arith.constant 0 : i32
    %c0_i32_0 = arith.constant 0 : i32
    %c0_i32_1 = arith.constant 0 : i32
    return %c0_i32, %c0_i32_0 : i32, i32
  }
  func.func @transform_3(%arg0: i32) -> (i32, i32) {
    %c0_i32 = arith.constant 0 : i32
    %c0_i32_0 = arith.constant 0 : i32
    %c0_i32_1 = arith.constant 0 : i32
    return %c0_i32, %c0_i32_0 : i32, i32
  }
  func.func @transform_4(%arg0: i32) -> (i32, i32) {
    %c0_i32 = arith.constant 0 : i32
    %c0_i32_0 = arith.constant 0 : i32
    %c0_i32_1 = arith.constant 0 : i32
    return %c0_i32, %c0_i32_0 : i32, i32
  }
  func.func @transform_5(%arg0: i32) -> (i32, i32) {
    %c0_i32 = arith.constant 0 : i32
    %c0_i32_0 = arith.constant 0 : i32
    %c0_i32_1 = arith.constant 0 : i32
    return %c0_i32, %c0_i32_0 : i32, i32
  }
  func.func @transform_6(%arg0: i32) -> (i32, i32) {
    %c0_i32 = arith.constant 0 : i32
    %c0_i32_0 = arith.constant 0 : i32
    %c0_i32_1 = arith.constant 0 : i32
    return %c0_i32, %c0_i32_0 : i32, i32
  }
  func.func @transform_7(%arg0: i32) -> (i32, i32) {
    %c0_i32 = arith.constant 0 : i32
    %c0_i32_0 = arith.constant 0 : i32
    %c0_i32_1 = arith.constant 0 : i32
    return %c0_i32, %c0_i32_0 : i32, i32
  }
}

</mosaic_0001>

<llo_original>
// kernel: tpu_custom_call.1
$region0: #{tpu_custom_call.1}
  #allocation0 [shape = 'u32[]', space=smem, size = 0x4, offset = 0x4, fixed_abs, tag = 'smem constant byte address 0x4 - core index']
  #allocation1 [shape = 'u32[144,128]{1,0:T(1,128)}', space=vmem, size = 0x12000, scoped, tag = 'internal scratch']
  %s0 = inlined_call_operand.hbm [shape: f32[128,128], index: 0, kind: input, shape index: {}]
  %s1 = inlined_call_operand.hbm [shape: f32[128,128], index: 1, kind: input, shape index: {}]
  %s2 = inlined_call_operand.hbm [shape: f32[128,128], index: 2, kind: input, shape index: {}]
  %s3 = inlined_call_operand.vmem [shape: f32[1,128], index: 3, kind: input, shape index: {}]
  %s4 = inlined_call_operand.hbm [shape: f32[128,128], index: 4, kind: input, shape index: {}]
  %s5 = inlined_call_operand.vmem [shape: f32[1,128], index: 5, kind: input, shape index: {}]
  %s6 = inlined_call_operand.hbm [shape: f32[128,128], index: 6, kind: output, shape index: {0}]
  %s7 = inlined_call_operand.hbm [shape: f32[128,128], index: 7, kind: output, shape index: {1}]
  %8 = xla_tuple %s6, %s7
  %s9 = sld [smem:[#allocation0]]
  $region58: #{tpu_custom_call.1} parent=0
    _
  %s11 = ssub.s32 1, %s9
  %s12 = scalar_select 0, %s11, %s9
  $region1: #{tpu_custom_call.1} parent=0
    #allocation2 [shape = 'u8[65536]{0}', space=vmem, size = 0x10000, scoped, tag = 'input window, operand 0, single buffered']
    #allocation3 [shape = 's32[1]{0}', space=sflag, size = 0x4, scoped, tag = 'scoped memory for tpu_custom_call.1']
    #allocation4 [shape = 's32[1]{0}', space=sflag, size = 0x4, scoped, tag = 'scoped memory for tpu_custom_call.1']
    #allocation5 [shape = 'u8[65536]{0}', space=vmem, size = 0x10000, scoped, tag = 'input window, operand 1, single buffered']
    #allocation6 [shape = 's32[1]{0}', space=sflag, size = 0x4, scoped, tag = 'scoped memory for tpu_custom_call.1']
    #allocation7 [shape = 'u8[65536]{0}', space=vmem, size = 0x10000, scoped, tag = 'input window, operand 2, single buffered']
    #allocation8 [shape = 'u8[65536]{0}', space=vmem, size = 0x10000, scoped, tag = 'input window, operand 4, single buffered']
    #allocation9 [shape = 's32[1]{0}', space=sflag, size = 0x4, scoped, tag = 'scoped memory for tpu_custom_call.1']
    #allocation10 [shape = 'u8[65536]{0}', space=vmem, size = 0x10000, scoped, tag = 'output window, operand 0, single buffered']
    #allocation11 [shape = 'u8[65536]{0}', space=vmem, size = 0x10000, scoped, tag = 'output window, operand 1, single buffered']
    #allocation12 [shape = 's32[1]{0}', space=sflag, size = 0x4, scoped, tag = 'scoped memory for tpu_custom_call.1']
    %13 = vsyncpa [#allocation3], 0
    %14 = vsyncpa [#allocation6], 0
    %15 = vsyncpa [#allocation9], 0
    %16 = vsyncpa [#allocation4], 0
    %17 = vsyncpa [#allocation12], 0
    // Predicated region
    $region2: #{tpu_custom_call.1} parent=1 // pred_check
      _
    $region3: #{tpu_custom_call.1} parent=1 // pred_check_branch
      %19 = sbr.rel (0) target = $region5
    $region4: #{tpu_custom_call.1} parent=1 // pred_region
      %s21 = ssub.s32 2048, 2048
      %22 = vsyncadd [#allocation3], %s21
      %s23 = sshll.u32 [#allocation2], 4
      %s24 = int_to_ptr.vmem [resolvable:$true] %s23
      %29 = dma.hbm_to_vmem [thread:$0]  %s0, 2048, %s24, [#allocation3], 128, 128, 8
    $region5: #{tpu_custom_call.1} parent=1 // pred_fallthru
      _
    // Predicated region
    $region6: #{tpu_custom_call.1} parent=1 // pred_check
      _
    $region7: #{tpu_custom_call.1} parent=1 // pred_check_branch
      %31 = sbr.rel (0) target = $region9
    $region8: #{tpu_custom_call.1} parent=1 // pred_region
      %s33 = ssub.s32 2048, 2048
      %34 = vsyncadd [#allocation6], %s33
      %s35 = sshll.u32 [#allocation5], 4
      %s36 = int_to_ptr.vmem [resolvable:$true] %s35
      %41 = dma.hbm_to_vmem [thread:$0]  %s1, 2048, %s36, [#allocation6], 128, 128, 8
    $region9: #{tpu_custom_call.1} parent=1 // pred_fallthru
      _
    // Predicated region
    $region10: #{tpu_custom_call.1} parent=1 // pred_check
      _
    $region11: #{tpu_custom_call.1} parent=1 // pred_check_branch
      %43 = sbr.rel (0) target = $region13
    $region12: #{tpu_custom_call.1} parent=1 // pred_region
      %s45 = ssub.s32 2048, 2048
      %46 = vsyncadd [#allocation6], %s45
      %s47 = sshll.u32 [#allocation7], 4
      %s48 = int_to_ptr.vmem [resolvable:$true] %s47
      %53 = dma.hbm_to_vmem [thread:$0]  %s2, 2048, %s48, [#allocation6], 128, 128, 8
    $region13: #{tpu_custom_call.1} parent=1 // pred_fallthru
      _
    // Predicated region
    $region14: #{tpu_custom_call.1} parent=1 // pred_check
      _
    $region15: #{tpu_custom_call.1} parent=1 // pred_check_branch
      %55 = sbr.rel (0) target = $region17
    $region16: #{tpu_custom_call.1} parent=1 // pred_region
      _
    $region17: #{tpu_custom_call.1} parent=1 // pred_fallthru
      _
    // Predicated region
    $region18: #{tpu_custom_call.1} parent=1 // pred_check
      _
    $region19: #{tpu_custom_call.1} parent=1 // pred_check_branch
      %57 = sbr.rel (0) target = $region21
    $region20: #{tpu_custom_call.1} parent=1 // pred_region
      %s59 = ssub.s32 2048, 2048
      %60 = vsyncadd [#allocation9], %s59
      %s61 = sshll.u32 [#allocation8], 4
      %s62 = int_to_ptr.vmem [resolvable:$true] %s61
      %67 = dma.hbm_to_vmem [thread:$0]  %s4, 2048, %s62, [#allocation9], 128, 128, 8
    $region21: #{tpu_custom_call.1} parent=1 // pred_fallthru
      _
    // Predicated region
    $region22: #{tpu_custom_call.1} parent=1 // pred_check
      _
    $region23: #{tpu_custom_call.1} parent=1 // pred_check_branch
      %69 = sbr.rel (0) target = $region25
    $region24: #{tpu_custom_call.1} parent=1 // pred_region
      _
    $region25: #{tpu_custom_call.1} parent=1 // pred_fallthru
      _
    // Predicated region
    $region26: #{tpu_custom_call.1} parent=1 // pred_check
      _
    $region27: #{tpu_custom_call.1} parent=1 // pred_check_branch
      %71 = sbr.rel (0) target = $region29
    $region28: #{tpu_custom_call.1} parent=1 // pred_region
      %72 = dma.done [#allocation3], 2048
    $region29: #{tpu_custom_call.1} parent=1 // pred_fallthru
      _
    // Predicated region
    $region30: #{tpu_custom_call.1} parent=1 // pred_check
      _
    $region31: #{tpu_custom_call.1} parent=1 // pred_check_branch
      %74 = sbr.rel (0) target = $region33
    $region32: #{tpu_custom_call.1} parent=1 // pred_region
      %75 = dma.done [#allocation6], 2048
    $region33: #{tpu_custom_call.1} parent=1 // pred_fallthru
      _
    // Predicated region
    $region34: #{tpu_custom_call.1} parent=1 // pred_check
      _
    $region35: #{tpu_custom_call.1} parent=1 // pred_check_branch
      %77 = sbr.rel (0) target = $region37
    $region36: #{tpu_custom_call.1} parent=1 // pred_region
      %78 = dma.done [#allocation6], 2048
    $region37: #{tpu_custom_call.1} parent=1 // pred_fallthru
      _
    // Predicated region
    $region38: #{tpu_custom_call.1} parent=1 // pred_check
      _
    $region39: #{tpu_custom_call.1} parent=1 // pred_check_branch
      %80 = sbr.rel (0) target = $region41
    $region40: #{tpu_custom_call.1} parent=1 // pred_region
      %81 = dma.done [#allocation9], 2048
    $region41: #{tpu_custom_call.1} parent=1 // pred_fallthru
      _
    %v82 = vld [vmem:[#allocation2] sm:$0xff]
    %v83 = vld [vmem:[#allocation2 + $0x8] sm:$0xff]
    %v84 = vld [vmem:[#allocation2 + $0x10] sm:$0xff]
    %v85 = vld [vmem:[#allocation2 + $0x18] sm:$0xff]
    %v86 = vld [vmem:[#allocation2 + $0x20] sm:$0xff]
    %v87 = vld [vmem:[#allocation2 + $0x28] sm:$0xff]
    %v88 = vld [vmem:[#allocation2 + $0x30] sm:$0xff]
    %v89 = vld [vmem:[#allocation2 + $0x38] sm:$0xff]
    %v90 = vld [vmem:[#allocation2 + $0x40] sm:$0xff]
    %v91 = vld [vmem:[#allocation2 + $0x48] sm:$0xff]
    %v92 = vld [vmem:[#allocation2 + $0x50] sm:$0xff]
    %v93 = vld [vmem:[#allocation2 + $0x58] sm:$0xff]
    %v94 = vld [vmem:[#allocation2 + $0x60] sm:$0xff]
    %v95 = vld [vmem:[#allocation2 + $0x68] sm:$0xff]
    %v96 = vld [vmem:[#allocation2 + $0x70] sm:$0xff]
    %v97 = vld [vmem:[#allocation2 + $0x78] sm:$0xff]
    %v98 = vld [vmem:[#allocation5] sm:$0xff]
    %v99 = vld [vmem:[#allocation5 + $0x8] sm:$0xff]
    %v100 = vld [vmem:[#allocation5 + $0x10] sm:$0xff]
    %v101 = vld [vmem:[#allocation5 + $0x18] sm:$0xff]
    %v102 = vld [vmem:[#allocation5 + $0x20] sm:$0xff]
    %v103 = vld [vmem:[#allocation5 + $0x28] sm:$0xff]
    %v104 = vld [vmem:[#allocation5 + $0x30] sm:$0xff]
    %v105 = vld [vmem:[#allocation5 + $0x38] sm:$0xff]
    %v106 = vld [vmem:[#allocation5 + $0x40] sm:$0xff]
    %v107 = vld [vmem:[#allocation5 + $0x48] sm:$0xff]
    %v108 = vld [vmem:[#allocation5 + $0x50] sm:$0xff]
    %v109 = vld [vmem:[#allocation5 + $0x58] sm:$0xff]
    %v110 = vld [vmem:[#allocation5 + $0x60] sm:$0xff]
    %v111 = vld [vmem:[#allocation5 + $0x68] sm:$0xff]
    %v112 = vld [vmem:[#allocation5 + $0x70] sm:$0xff]
    %v113 = vld [vmem:[#allocation5 + $0x78] sm:$0xff]
    %v114 = vld [vmem:[#allocation7] sm:$0xff]
    %v115 = vld [vmem:[#allocation7 + $0x8] sm:$0xff]
    %v116 = vld [vmem:[#allocation7 + $0x10] sm:$0xff]
    %v117 = vld [vmem:[#allocation7 + $0x18] sm:$0xff]
    %v118 = vld [vmem:[#allocation7 + $0x20] sm:$0xff]
    %v119 = vld [vmem:[#allocation7 + $0x28] sm:$0xff]
    %v120 = vld [vmem:[#allocation7 + $0x30] sm:$0xff]
    %v121 = vld [vmem:[#allocation7 + $0x38] sm:$0xff]
    %v122 = vld [vmem:[#allocation7 + $0x40] sm:$0xff]
    %v123 = vld [vmem:[#allocation7 + $0x48] sm:$0xff]
    %v124 = vld [vmem:[#allocation7 + $0x50] sm:$0xff]
    %v125 = vld [vmem:[#allocation7 + $0x58] sm:$0xff]
    %v126 = vld [vmem:[#allocation7 + $0x60] sm:$0xff]
    %v127 = vld [vmem:[#allocation7 + $0x68] sm:$0xff]
    %v128 = vld [vmem:[#allocation7 + $0x70] sm:$0xff]
    %v129 = vld [vmem:[#allocation7 + $0x78] sm:$0xff]
    %130 = vmatprep.subr.mxu0 0.0
    %131 = vmatpush1.msra.mxu0 %v114
    %132 = vmatprep.subr.mxu0 0.0
    %133 = vmatpush1.msra.mxu0 %v115
    %134 = vmatprep.subr.mxu0 0.0
    %135 = vmatpush1.msra.mxu0 %v116
    %136 = vmatprep.subr.mxu0 0.0
    %137 = vmatpush1.msra.mxu0 %v117
    %138 = vmatprep.subr.mxu0 0.0
    %139 = vmatpush1.msra.mxu0 %v118
    %140 = vmatprep.subr.mxu0 0.0
    %141 = vmatpush1.msra.mxu0 %v119
    %142 = vmatprep.subr.mxu0 0.0
    %143 = vmatpush1.msra.mxu0 %v120
    %144 = vmatprep.subr.mxu0 0.0
    %145 = vmatpush1.msra.mxu0 %v121
    %146 = vmatprep.subr.mxu0 0.0
    %147 = vmatpush1.msra.mxu0 %v122
    %148 = vmatprep.subr.mxu0 0.0
    %149 = vmatpush1.msra.mxu0 %v123
    %150 = vmatprep.subr.mxu0 0.0
    %151 = vmatpush1.msra.mxu0 %v124
    %152 = vmatprep.subr.mxu0 0.0
    %153 = vmatpush1.msra.mxu0 %v125
    %154 = vmatprep.subr.mxu0 0.0
    %155 = vmatpush1.msra.mxu0 %v126
    %156 = vmatprep.subr.mxu0 0.0
    %157 = vmatpush1.msra.mxu0 %v127
    %158 = vmatprep.subr.mxu0 0.0
    %159 = vmatpush1.msra.mxu0 %v128
    %160 = vmatprep.subr.mxu0 0.0
    %161 = vmatpush1.msra.mxu0 %v129
    %162 = vmatprep.subr.mxu0 0.0
    %163 = vmatpush1.msra.mxu0 0.0
    %164 = vmatprep.subr.mxu0 0.0
    %165 = vmatpush1.msra.mxu0 0.0
    %166 = vmatprep.subr.mxu0 0.0
    %167 = vmatpush1.msra.mxu0 0.0
    %168 = vmatprep.subr.mxu0 0.0
    %169 = vmatpush1.msra.mxu0 0.0
    %170 = vmatprep.subr.mxu0 0.0
    %171 = vmatpush1.msra.mxu0 0.0
    %172 = vmatprep.subr.mxu0 0.0
    %173 = vmatpush1.msra.mxu0 0.0
    %174 = vmatprep.subr.mxu0 0.0
    %175 = vmatpush1.msra.mxu0 0.0
    %176 = vmatprep.subr.mxu0 0.0
    %177 = vmatpush1.msra.mxu0 0.0
    %178 = vmatprep.subr.mxu0 0.0
    %179 = vmatpush1.msra.mxu0 0.0
    %180 = vmatprep.subr.mxu0 0.0
    %181 = vmatpush1.msra.mxu0 0.0
    %182 = vmatprep.subr.mxu0 0.0
    %183 = vmatpush1.msra.mxu0 0.0
    %184 = vmatprep.subr.mxu0 0.0
    %185 = vmatpush1.msra.mxu0 0.0
    %186 = vmatprep.subr.mxu0 0.0
    %187 = vmatpush1.msra.mxu0 0.0
    %188 = vmatprep.subr.mxu0 0.0
    %189 = vmatpush1.msra.mxu0 0.0
    %190 = vmatprep.subr.mxu0 0.0
    %191 = vmatpush1.msra.mxu0 0.0
    %192 = vmatprep.subr.mxu0 0.0
    %193 = vmatpush1.msra.mxu0 0.0
    %194 = vmatprep.mubr.f32.mxu0 0.0
    %195 = vmatmul.mubr.f32.gmra.mrb[0].mxu0 %v98
    %v196 = vpop.f32.mrb[0].mxu0
    %v197 = vadd.f32 0.0, %v196
    %v198 = vpop.f32.mrb[0].mxu0
    %199 = vmatprep.mubr.f32.mxu0 0.0
    %200 = vmatmul.mubr.f32.gmra.mrb[0].mxu0 %v99
    %v201 = vpop.f32.mrb[0].mxu0
    %v202 = vadd.f32 0.0, %v201
    %v203 = vpop.f32.mrb[0].mxu0
    %204 = vmatprep.mubr.f32.mxu0 0.0
    %205 = vmatmul.mubr.f32.gmra.mrb[0].mxu0 %v100
    %v206 = vpop.f32.mrb[0].mxu0
    %v207 = vadd.f32 0.0, %v206
    %v208 = vpop.f32.mrb[0].mxu0
    %209 = vmatprep.mubr.f32.mxu0 0.0
    %210 = vmatmul.mubr.f32.gmra.mrb[0].mxu0 %v101
    %v211 = vpop.f32.mrb[0].mxu0
    %v212 = vadd.f32 0.0, %v211
    %v213 = vpop.f32.mrb[0].mxu0
    %214 = vmatprep.mubr.f32.mxu0 0.0
    %215 = vmatmul.mubr.f32.gmra.mrb[0].mxu0 %v102
    %v216 = vpop.f32.mrb[0].mxu0
    %v217 = vadd.f32 0.0, %v216
    %v218 = vpop.f32.mrb[0].mxu0
    %219 = vmatprep.mubr.f32.mxu0 0.0
    %220 = vmatmul.mubr.f32.gmra.mrb[0].mxu0 %v103
    %v221 = vpop.f32.mrb[0].mxu0
    %v222 = vadd.f32 0.0, %v221
    %v223 = vpop.f32.mrb[0].mxu0
    %224 = vmatprep.mubr.f32.mxu0 0.0
    %225 = vmatmul.mubr.f32.gmra.mrb[0].mxu0 %v104
    %v226 = vpop.f32.mrb[0].mxu0
    %v227 = vadd.f32 0.0, %v226
    %v228 = vpop.f32.mrb[0].mxu0
    %229 = vmatprep.mubr.f32.mxu0 0.0
    %230 = vmatmul.mubr.f32.gmra.mrb[0].mxu0 %v105
    %v231 = vpop.f32.mrb[0].mxu0
    %v232 = vadd.f32 0.0, %v231
    %v233 = vpop.f32.mrb[0].mxu0
    %234 = vmatprep.mubr.f32.mxu0 0.0
    %235 = vmatmul.mubr.f32.gmra.mrb[0].mxu0 %v106
    %v236 = vpop.f32.mrb[0].mxu0
    %v237 = vadd.f32 0.0, %v236
    %v238 = vpop.f32.mrb[0].mxu0
    %239 = vmatprep.mubr.f32.mxu0 0.0
    %240 = vmatmul.mubr.f32.gmra.mrb[0].mxu0 %v107
    %v241 = vpop.f32.mrb[0].mxu0
    %v242 = vadd.f32 0.0, %v241
    %v243 = vpop.f32.mrb[0].mxu0
    %244 = vmatprep.mubr.f32.mxu0 0.0
    %245 = vmatmul.mubr.f32.gmra.mrb[0].mxu0 %v108
    %v246 = vpop.f32.mrb[0].mxu0
    %v247 = vadd.f32 0.0, %v246
    %v248 = vpop.f32.mrb[0].mxu0
    %249 = vmatprep.mubr.f32.mxu0 0.0
    %250 = vmatmul.mubr.f32.gmra.mrb[0].mxu0 %v109
    %v251 = vpop.f32.mrb[0].mxu0
    %v252 = vadd.f32 0.0, %v251
    %v253 = vpop.f32.mrb[0].mxu0
    %254 = vmatprep.mubr.f32.mxu0 0.0
    %255 = vmatmul.mubr.f32.gmra.mrb[0].mxu0 %v110
    %v256 = vpop.f32.mrb[0].mxu0
    %v257 = vadd.f32 0.0, %v256
    %v258 = vpop.f32.mrb[0].mxu0
    %259 = vmatprep.mubr.f32.mxu0 0.0
    %260 = vmatmul.mubr.f32.gmra.mrb[0].mxu0 %v111
    %v261 = vpop.f32.mrb[0].mxu0
    %v262 = vadd.f32 0.0, %v261
    %v263 = vpop.f32.mrb[0].mxu0
    %264 = vmatprep.mubr.f32.mxu0 0.0
    %265 = vmatmul.mubr.f32.gmra.mrb[0].mxu0 %v112
    %v266 = vpop.f32.mrb[0].mxu0
    %v267 = vadd.f32 0.0, %v266
    %v268 = vpop.f32.mrb[0].mxu0
    %269 = vmatprep.mubr.f32.mxu0 0.0
    %270 = vmatmul.mubr.f32.gmra.mrb[0].mxu0 %v113
    %v271 = vpop.f32.mrb[0].mxu0
    %v272 = vadd.f32 0.0, %v271
    %v273 = vpop.f32.mrb[0].mxu0
    %274 = vdwg.mxu0
    %v275 = vld [vmem:[%s3] sm:$0x1]
    %v277 = vlaneseq
    %v278 = vshrl.u32 %v277, 7
    %v279 = vsub.s32 0, %v278
    %v280 = vrot.slane %v275, %v279
    %282 = vmatprep.subr.mxu0 0.0
    %283 = vmatpush1.msra.mxu0 %v197
    %284 = vmatprep.subr.mxu0 0.0
    %285 = vmatpush1.msra.mxu0 %v202
    %286 = vmatprep.subr.mxu0 0.0
    %287 = vmatpush1.msra.mxu0 %v207
    %288 = vmatprep.subr.mxu0 0.0
    %289 = vmatpush1.msra.mxu0 %v212
    %290 = vmatprep.subr.mxu0 0.0
    %291 = vmatpush1.msra.mxu0 %v217
    %292 = vmatprep.subr.mxu0 0.0
    %293 = vmatpush1.msra.mxu0 %v222
    %294 = vmatprep.subr.mxu0 0.0
    %295 = vmatpush1.msra.mxu0 %v227
    %296 = vmatprep.subr.mxu0 0.0
    %297 = vmatpush1.msra.mxu0 %v232
    %298 = vmatprep.subr.mxu0 0.0
    %299 = vmatpush1.msra.mxu0 %v237
    %300 = vmatprep.subr.mxu0 0.0
    %301 = vmatpush1.msra.mxu0 %v242
    %302 = vmatprep.subr.mxu0 0.0
    %303 = vmatpush1.msra.mxu0 %v247
    %304 = vmatprep.subr.mxu0 0.0
    %305 = vmatpush1.msra.mxu0 %v252
    %306 = vmatprep.subr.mxu0 0.0
    %307 = vmatpush1.msra.mxu0 %v257
    %308 = vmatprep.subr.mxu0 0.0
    %309 = vmatpush1.msra.mxu0 %v262
    %310 = vmatprep.subr.mxu0 0.0
    %311 = vmatpush1.msra.mxu0 %v267
    %312 = vmatprep.subr.mxu0 0.0
    %313 = vmatpush1.msra.mxu0 %v272
    %314 = vmatprep.subr.mxu0 0.0
    %315 = vmatpush1.msra.mxu0 0.0
    %316 = vmatprep.subr.mxu0 0.0
    %317 = vmatpush1.msra.mxu0 0.0
    %318 = vmatprep.subr.mxu0 0.0
    %319 = vmatpush1.msra.mxu0 0.0
    %320 = vmatprep.subr.mxu0 0.0
    %321 = vmatpush1.msra.mxu0 0.0
    %322 = vmatprep.subr.mxu0 0.0
    %323 = vmatpush1.msra.mxu0 0.0
    %324 = vmatprep.subr.mxu0 0.0
    %325 = vmatpush1.msra.mxu0 0.0
    %326 = vmatprep.subr.mxu0 0.0
    %327 = vmatpush1.msra.mxu0 0.0
    %328 = vmatprep.subr.mxu0 0.0
    %329 = vmatpush1.msra.mxu0 0.0
    %330 = vmatprep.subr.mxu0 0.0
    %331 = vmatpush1.msra.mxu0 0.0
    %332 = vmatprep.subr.mxu0 0.0
    %333 = vmatpush1.msra.mxu0 0.0
    %334 = vmatprep.subr.mxu0 0.0
    %335 = vmatpush1.msra.mxu0 0.0
    %336 = vmatprep.subr.mxu0 0.0
    %337 = vmatpush1.msra.mxu0 0.0
    %338 = vmatprep.subr.mxu0 0.0
    %339 = vmatpush1.msra.mxu0 0.0
    %340 = vmatprep.subr.mxu0 0.0
    %341 = vmatpush1.msra.mxu0 0.0
    %342 = vmatprep.subr.mxu0 0.0
    %343 = vmatpush1.msra.mxu0 0.0
    %344 = vmatprep.subr.mxu0 0.0
    %345 = vmatpush1.msra.mxu0 0.0
    %346 = vmatprep.mubr.f32.mxu0 0.0
    %347 = vmatmul.mubr.f32.gmra.mrb[0].mxu0 %v82
    %v348 = vpop.f32.mrb[0].mxu0
    %v349 = vadd.f32 %v280, %v348
    %v350 = vpop.f32.mrb[0].mxu0
    %351 = vmatprep.mubr.f32.mxu0 0.0
    %352 = vmatmul.mubr.f32.gmra.mrb[0].mxu0 %v83
    %v353 = vpop.f32.mrb[0].mxu0
    %v354 = vadd.f32 %v280, %v353
    %v355 = vpop.f32.mrb[0].mxu0
    %356 = vmatprep.mubr.f32.mxu0 0.0
    %357 = vmatmul.mubr.f32.gmra.mrb[0].mxu0 %v84
    %v358 = vpop.f32.mrb[0].mxu0
    %v359 = vadd.f32 %v280, %v358
    %v360 = vpop.f32.mrb[0].mxu0
    %361 = vmatprep.mubr.f32.mxu0 0.0
    %362 = vmatmul.mubr.f32.gmra.mrb[0].mxu0 %v85
    %v363 = vpop.f32.mrb[0].mxu0
    %v364 = vadd.f32 %v280, %v363
    %v365 = vpop.f32.mrb[0].mxu0
    %366 = vmatprep.mubr.f32.mxu0 0.0
    %367 = vmatmul.mubr.f32.gmra.mrb[0].mxu0 %v86
    %v368 = vpop.f32.mrb[0].mxu0
    %v369 = vadd.f32 %v280, %v368
    %v370 = vpop.f32.mrb[0].mxu0
    %371 = vmatprep.mubr.f32.mxu0 0.0
    %372 = vmatmul.mubr.f32.gmra.mrb[0].mxu0 %v87
    %v373 = vpop.f32.mrb[0].mxu0
    %v374 = vadd.f32 %v280, %v373
    %v375 = vpop.f32.mrb[0].mxu0
    %376 = vmatprep.mubr.f32.mxu0 0.0
    %377 = vmatmul.mubr.f32.gmra.mrb[0].mxu0 %v88
    %v378 = vpop.f32.mrb[0].mxu0
    %v379 = vadd.f32 %v280, %v378
    %v380 = vpop.f32.mrb[0].mxu0
    %381 = vmatprep.mubr.f32.mxu0 0.0
    %382 = vmatmul.mubr.f32.gmra.mrb[0].mxu0 %v89
    %v383 = vpop.f32.mrb[0].mxu0
    %v384 = vadd.f32 %v280, %v383
    %v385 = vpop.f32.mrb[0].mxu0
    %386 = vmatprep.mubr.f32.mxu0 0.0
    %387 = vmatmul.mubr.f32.gmra.mrb[0].mxu0 %v90
    %v388 = vpop.f32.mrb[0].mxu0
    %v389 = vadd.f32 %v280, %v388
    %v390 = vpop.f32.mrb[0].mxu0
    %391 = vmatprep.mubr.f32.mxu0 0.0
    %392 = vmatmul.mubr.f32.gmra.mrb[0].mxu0 %v91
    %v393 = vpop.f32.mrb[0].mxu0
    %v394 = vadd.f32 %v280, %v393
    %v395 = vpop.f32.mrb[0].mxu0
    %396 = vmatprep.mubr.f32.mxu0 0.0
    %397 = vmatmul.mubr.f32.gmra.mrb[0].mxu0 %v92
    %v398 = vpop.f32.mrb[0].mxu0
    %v399 = vadd.f32 %v280, %v398
    %v400 = vpop.f32.mrb[0].mxu0
    %401 = vmatprep.mubr.f32.mxu0 0.0
    %402 = vmatmul.mubr.f32.gmra.mrb[0].mxu0 %v93
    %v403 = vpop.f32.mrb[0].mxu0
    %v404 = vadd.f32 %v280, %v403
    %v405 = vpop.f32.mrb[0].mxu0
    %406 = vmatprep.mubr.f32.mxu0 0.0
    %407 = vmatmul.mubr.f32.gmra.mrb[0].mxu0 %v94
    %v408 = vpop.f32.mrb[0].mxu0
    %v409 = vadd.f32 %v280, %v408
    %v410 = vpop.f32.mrb[0].mxu0
    %411 = vmatprep.mubr.f32.mxu0 0.0
    %412 = vmatmul.mubr.f32.gmra.mrb[0].mxu0 %v95
    %v413 = vpop.f32.mrb[0].mxu0
    %v414 = vadd.f32 %v280, %v413
    %v415 = vpop.f32.mrb[0].mxu0
    %416 = vmatprep.mubr.f32.mxu0 0.0
    %417 = vmatmul.mubr.f32.gmra.mrb[0].mxu0 %v96
    %v418 = vpop.f32.mrb[0].mxu0
    %v419 = vadd.f32 %v280, %v418
    %v420 = vpop.f32.mrb[0].mxu0
    %421 = vmatprep.mubr.f32.mxu0 0.0
    %422 = vmatmul.mubr.f32.gmra.mrb[0].mxu0 %v97
    %v423 = vpop.f32.mrb[0].mxu0
    %v424 = vadd.f32 %v280, %v423
    %v425 = vpop.f32.mrb[0].mxu0
    %426 = vdwg.mxu0
    %427 = vst [vmem:[#allocation11] sm:$0xff] %v349
    %428 = vst [vmem:[#allocation11 + $0x8] sm:$0xff] %v354
    %429 = vst [vmem:[#allocation11 + $0x10] sm:$0xff] %v359
    %430 = vst [vmem:[#allocation11 + $0x18] sm:$0xff] %v364
    %431 = vst [vmem:[#allocation11 + $0x20] sm:$0xff] %v369
    %432 = vst [vmem:[#allocation11 + $0x28] sm:$0xff] %v374
    %433 = vst [vmem:[#allocation11 + $0x30] sm:$0xff] %v379
    %434 = vst [vmem:[#allocation11 + $0x38] sm:$0xff] %v384
    %435 = vst [vmem:[#allocation11 + $0x40] sm:$0xff] %v389
    %436 = vst [vmem:[#allocation11 + $0x48] sm:$0xff] %v394
    %437 = vst [vmem:[#allocation11 + $0x50] sm:$0xff] %v399
    %438 = vst [vmem:[#allocation11 + $0x58] sm:$0xff] %v404
    %439 = vst [vmem:[#allocation11 + $0x60] sm:$0xff] %v409
    %440 = vst [vmem:[#allocation11 + $0x68] sm:$0xff] %v414
    %441 = vst [vmem:[#allocation11 + $0x70] sm:$0xff] %v419
    %442 = vst [vmem:[#allocation11 + $0x78] sm:$0xff] %v424
    %v443 = vmax.f32 %v349, 0.0
    %v444 = vmax.f32 %v354, 0.0
    %v445 = vmax.f32 %v359, 0.0
    %v446 = vmax.f32 %v364, 0.0
    %v447 = vmax.f32 %v369, 0.0
    %v448 = vmax.f32 %v374, 0.0
    %v449 = vmax.f32 %v379, 0.0
    %v450 = vmax.f32 %v384, 0.0
    %v451 = vmax.f32 %v389, 0.0
    %v452 = vmax.f32 %v394, 0.0
    %v453 = vmax.f32 %v399, 0.0
    %v454 = vmax.f32 %v404, 0.0
    %v455 = vmax.f32 %v409, 0.0
    %v456 = vmax.f32 %v414, 0.0
    %v457 = vmax.f32 %v419, 0.0
    %v458 = vmax.f32 %v424, 0.0
    %v459 = vld [vmem:[#allocation8] sm:$0xff]
    %v460 = vld [vmem:[#allocation8 + $0x8] sm:$0xff]
    %v461 = vld [vmem:[#allocation8 + $0x10] sm:$0xff]
    %v462 = vld [vmem:[#allocation8 + $0x18] sm:$0xff]
    %v463 = vld [vmem:[#allocation8 + $0x20] sm:$0xff]
    %v464 = vld [vmem:[#allocation8 + $0x28] sm:$0xff]
    %v465 = vld [vmem:[#allocation8 + $0x30] sm:$0xff]
    %v466 = vld [vmem:[#allocation8 + $0x38] sm:$0xff]
    %v467 = vld [vmem:[#allocation8 + $0x40] sm:$0xff]
    %v468 = vld [vmem:[#allocation8 + $0x48] sm:$0xff]
    %v469 = vld [vmem:[#allocation8 + $0x50] sm:$0xff]
    %v470 = vld [vmem:[#allocation8 + $0x58] sm:$0xff]
    %v471 = vld [vmem:[#allocation8 + $0x60] sm:$0xff]
    %v472 = vld [vmem:[#allocation8 + $0x68] sm:$0xff]
    %v473 = vld [vmem:[#allocation8 + $0x70] sm:$0xff]
    %v474 = vld [vmem:[#allocation8 + $0x78] sm:$0xff]
    %475 = vmatprep.subr.mxu0 0.0
    %476 = vmatpush1.msra.mxu0 %v459
    %477 = vmatprep.subr.mxu0 0.0
    %478 = vmatpush1.msra.mxu0 %v460
    %479 = vmatprep.subr.mxu0 0.0
    %480 = vmatpush1.msra.mxu0 %v461
    %481 = vmatprep.subr.mxu0 0.0
    %482 = vmatpush1.msra.mxu0 %v462
    %483 = vmatprep.subr.mxu0 0.0
    %484 = vmatpush1.msra.mxu0 %v463
    %485 = vmatprep.subr.mxu0 0.0
    %486 = vmatpush1.msra.mxu0 %v464
    %487 = vmatprep.subr.mxu0 0.0
    %488 = vmatpush1.msra.mxu0 %v465
    %489 = vmatprep.subr.mxu0 0.0
    %490 = vmatpush1.msra.mxu0 %v466
    %491 = vmatprep.subr.mxu0 0.0
    %492 = vmatpush1.msra.mxu0 %v467
    %493 = vmatprep.subr.mxu0 0.0
    %494 = vmatpush1.msra.mxu0 %v468
    %495 = vmatprep.subr.mxu0 0.0
    %496 = vmatpush1.msra.mxu0 %v469
    %497 = vmatprep.subr.mxu0 0.0
    %498 = vmatpush1.msra.mxu0 %v470
    %499 = vmatprep.subr.mxu0 0.0
    %500 = vmatpush1.msra.mxu0 %v471
    %501 = vmatprep.subr.mxu0 0.0
    %502 = vmatpush1.msra.mxu0 %v472
    %503 = vmatprep.subr.mxu0 0.0
    %504 = vmatpush1.msra.mxu0 %v473
    %505 = vmatprep.subr.mxu0 0.0
    %506 = vmatpush1.msra.mxu0 %v474
    %507 = vmatprep.subr.mxu0 0.0
    %508 = vmatpush1.msra.mxu0 0.0
    %509 = vmatprep.subr.mxu0 0.0
    %510 = vmatpush1.msra.mxu0 0.0
    %511 = vmatprep.subr.mxu0 0.0
    %512 = vmatpush1.msra.mxu0 0.0
    %513 = vmatprep.subr.mxu0 0.0
    %514 = vmatpush1.msra.mxu0 0.0
    %515 = vmatprep.subr.mxu0 0.0
    %516 = vmatpush1.msra.mxu0 0.0
    %517 = vmatprep.subr.mxu0 0.0
    %518 = vmatpush1.msra.mxu0 0.0
    %519 = vmatprep.subr.mxu0 0.0
    %520 = vmatpush1.msra.mxu0 0.0
    %521 = vmatprep.subr.mxu0 0.0
    %522 = vmatpush1.msra.mxu0 0.0
    %523 = vmatprep.subr.mxu0 0.0
    %524 = vmatpush1.msra.mxu0 0.0
    %525 = vmatprep.subr.mxu0 0.0
    %526 = vmatpush1.msra.mxu0 0.0
    %527 = vmatprep.subr.mxu0 0.0
    %528 = vmatpush1.msra.mxu0 0.0
    %529 = vmatprep.subr.mxu0 0.0
    %530 = vmatpush1.msra.mxu0 0.0
    %531 = vmatprep.subr.mxu0 0.0
    %532 = vmatpush1.msra.mxu0 0.0
    %533 = vmatprep.subr.mxu0 0.0
    %534 = vmatpush1.msra.mxu0 0.0
    %535 = vmatprep.subr.mxu0 0.0
    %536 = vmatpush1.msra.mxu0 0.0
    %537 = vmatprep.subr.mxu0 0.0
    %538 = vmatpush1.msra.mxu0 0.0
    %539 = vmatprep.mubr.f32.mxu0 0.0
    %540 = vmatmul.mubr.f32.gmra.mrb[0].mxu0 %v443
    %v541 = vpop.f32.mrb[0].mxu0
    %v542 = vadd.f32 0.0, %v541
    %v543 = vpop.f32.mrb[0].mxu0
    %544 = vmatprep.mubr.f32.mxu0 0.0
    %545 = vmatmul.mubr.f32.gmra.mrb[0].mxu0 %v444
    %v546 = vpop.f32.mrb[0].mxu0
    %v547 = vadd.f32 0.0, %v546
    %v548 = vpop.f32.mrb[0].mxu0
    %549 = vmatprep.mubr.f32.mxu0 0.0
    %550 = vmatmul.mubr.f32.gmra.mrb[0].mxu0 %v445
    %v551 = vpop.f32.mrb[0].mxu0
    %v552 = vadd.f32 0.0, %v551
    %v553 = vpop.f32.mrb[0].mxu0
    %554 = vmatprep.mubr.f32.mxu0 0.0
    %555 = vmatmul.mubr.f32.gmra.mrb[0].mxu0 %v446
    %v556 = vpop.f32.mrb[0].mxu0
    %v557 = vadd.f32 0.0, %v556
    %v558 = vpop.f32.mrb[0].mxu0
    %559 = vmatprep.mubr.f32.mxu0 0.0
    %560 = vmatmul.mubr.f32.gmra.mrb[0].mxu0 %v447
    %v561 = vpop.f32.mrb[0].mxu0
    %v562 = vadd.f32 0.0, %v561
    %v563 = vpop.f32.mrb[0].mxu0
    %564 = vmatprep.mubr.f32.mxu0 0.0
    %565 = vmatmul.mubr.f32.gmra.mrb[0].mxu0 %v448
    %v566 = vpop.f32.mrb[0].mxu0
    %v567 = vadd.f32 0.0, %v566
    %v568 = vpop.f32.mrb[0].mxu0
    %569 = vmatprep.mubr.f32.mxu0 0.0
    %570 = vmatmul.mubr.f32.gmra.mrb[0].mxu0 %v449
    %v571 = vpop.f32.mrb[0].mxu0
    %v572 = vadd.f32 0.0, %v571
    %v573 = vpop.f32.mrb[0].mxu0
    %574 = vmatprep.mubr.f32.mxu0 0.0
    %575 = vmatmul.mubr.f32.gmra.mrb[0].mxu0 %v450
    %v576 = vpop.f32.mrb[0].mxu0
    %v577 = vadd.f32 0.0, %v576
    %v578 = vpop.f32.mrb[0].mxu0
    %579 = vmatprep.mubr.f32.mxu0 0.0
    %580 = vmatmul.mubr.f32.gmra.mrb[0].mxu0 %v451
    %v581 = vpop.f32.mrb[0].mxu0
    %v582 = vadd.f32 0.0, %v581
    %v583 = vpop.f32.mrb[0].mxu0
    %584 = vmatprep.mubr.f32.mxu0 0.0
    %585 = vmatmul.mubr.f32.gmra.mrb[0].mxu0 %v452
    %v586 = vpop.f32.mrb[0].mxu0
    %v587 = vadd.f32 0.0, %v586
    %v588 = vpop.f32.mrb[0].mxu0
    %589 = vmatprep.mubr.f32.mxu0 0.0
    %590 = vmatmul.mubr.f32.gmra.mrb[0].mxu0 %v453
    %v591 = vpop.f32.mrb[0].mxu0
    %v592 = vadd.f32 0.0, %v591
    %v593 = vpop.f32.mrb[0].mxu0
    %594 = vmatprep.mubr.f32.mxu0 0.0
    %595 = vmatmul.mubr.f32.gmra.mrb[0].mxu0 %v454
    %v596 = vpop.f32.mrb[0].mxu0
    %v597 = vadd.f32 0.0, %v596
    %v598 = vpop.f32.mrb[0].mxu0
    %599 = vmatprep.mubr.f32.mxu0 0.0
    %600 = vmatmul.mubr.f32.gmra.mrb[0].mxu0 %v455
    %v601 = vpop.f32.mrb[0].mxu0
    %v602 = vadd.f32 0.0, %v601
    %v603 = vpop.f32.mrb[0].mxu0
    %604 = vmatprep.mubr.f32.mxu0 0.0
    %605 = vmatmul.mubr.f32.gmra.mrb[0].mxu0 %v456
    %v606 = vpop.f32.mrb[0].mxu0
    %v607 = vadd.f32 0.0, %v606
    %v608 = vpop.f32.mrb[0].mxu0
    %609 = vmatprep.mubr.f32.mxu0 0.0
    %610 = vmatmul.mubr.f32.gmra.mrb[0].mxu0 %v457
    %v611 = vpop.f32.mrb[0].mxu0
    %v612 = vadd.f32 0.0, %v611
    %v613 = vpop.f32.mrb[0].mxu0
    %614 = vmatprep.mubr.f32.mxu0 0.0
    %615 = vmatmul.mubr.f32.gmra.mrb[0].mxu0 %v458
    %v616 = vpop.f32.mrb[0].mxu0
    %v617 = vadd.f32 0.0, %v616
    %v618 = vpop.f32.mrb[0].mxu0
    %619 = vdwg.mxu0
    %v620 = vld [vmem:[%s5] sm:$0x1]
    %v622 = vlaneseq
    %v623 = vshrl.u32 %v622, 7
    %v624 = vsub.s32 0, %v623
    %v625 = vrot.slane %v620, %v624
    %627 = vmatprep.subr.mxu0 0.0
    %628 = vmatpush1.msra.mxu0 %v542
    %629 = vmatprep.subr.mxu0 0.0
    %630 = vmatpush1.msra.mxu0 %v547
    %631 = vmatprep.subr.mxu0 0.0
    %632 = vmatpush1.msra.mxu0 %v552
    %633 = vmatprep.subr.mxu0 0.0
    %634 = vmatpush1.msra.mxu0 %v557
    %635 = vmatprep.subr.mxu0 0.0
    %636 = vmatpush1.msra.mxu0 %v562
    %637 = vmatprep.subr.mxu0 0.0
    %638 = vmatpush1.msra.mxu0 %v567
    %639 = vmatprep.subr.mxu0 0.0
    %640 = vmatpush1.msra.mxu0 %v572
    %641 = vmatprep.subr.mxu0 0.0
    %642 = vmatpush1.msra.mxu0 %v577
    %643 = vmatprep.subr.mxu0 0.0
    %644 = vmatpush1.msra.mxu0 %v582
    %645 = vmatprep.subr.mxu0 0.0
    %646 = vmatpush1.msra.mxu0 %v587
    %647 = vmatprep.subr.mxu0 0.0
    %648 = vmatpush1.msra.mxu0 %v592
    %649 = vmatprep.subr.mxu0 0.0
    %650 = vmatpush1.msra.mxu0 %v597
    %651 = vmatprep.subr.mxu0 0.0
    %652 = vmatpush1.msra.mxu0 %v602
    %653 = vmatprep.subr.mxu0 0.0
    %654 = vmatpush1.msra.mxu0 %v607
    %655 = vmatprep.subr.mxu0 0.0
    %656 = vmatpush1.msra.mxu0 %v612
    %657 = vmatprep.subr.mxu0 0.0
    %658 = vmatpush1.msra.mxu0 %v617
    %659 = vmatprep.subr.mxu0 0.0
    %660 = vmatpush1.msra.mxu0 0.0
    %661 = vmatprep.subr.mxu0 0.0
    %662 = vmatpush1.msra.mxu0 0.0
    %663 = vmatprep.subr.mxu0 0.0
    %664 = vmatpush1.msra.mxu0 0.0
    %665 = vmatprep.subr.mxu0 0.0
    %666 = vmatpush1.msra.mxu0 0.0
    %667 = vmatprep.subr.mxu0 0.0
    %668 = vmatpush1.msra.mxu0 0.0
    %669 = vmatprep.subr.mxu0 0.0
    %670 = vmatpush1.msra.mxu0 0.0
    %671 = vmatprep.subr.mxu0 0.0
    %672 = vmatpush1.msra.mxu0 0.0
    %673 = vmatprep.subr.mxu0 0.0
    %674 = vmatpush1.msra.mxu0 0.0
    %675 = vmatprep.subr.mxu0 0.0
    %676 = vmatpush1.msra.mxu0 0.0
    %677 = vmatprep.subr.mxu0 0.0
    %678 = vmatpush1.msra.mxu0 0.0
    %679 = vmatprep.subr.mxu0 0.0
    %680 = vmatpush1.msra.mxu0 0.0
    %681 = vmatprep.subr.mxu0 0.0
    %682 = vmatpush1.msra.mxu0 0.0
    %683 = vmatprep.subr.mxu0 0.0
    %684 = vmatpush1.msra.mxu0 0.0
    %685 = vmatprep.subr.mxu0 0.0
    %686 = vmatpush1.msra.mxu0 0.0
    %687 = vmatprep.subr.mxu0 0.0
    %688 = vmatpush1.msra.mxu0 0.0
    %689 = vmatprep.subr.mxu0 0.0
    %690 = vmatpush1.msra.mxu0 0.0
    %691 = vmatprep.mubr.f32.mxu0 0.0
    %692 = vmatmul.mubr.f32.gmra.mrb[0].mxu0 %v82
    %v693 = vpop.f32.mrb[0].mxu0
    %v694 = vadd.f32 %v625, %v693
    %v695 = vpop.f32.mrb[0].mxu0
    %696 = vmatprep.mubr.f32.mxu0 0.0
    %697 = vmatmul.mubr.f32.gmra.mrb[0].mxu0 %v83
    %v698 = vpop.f32.mrb[0].mxu0
    %v699 = vadd.f32 %v625, %v698
    %v700 = vpop.f32.mrb[0].mxu0
    %701 = vmatprep.mubr.f32.mxu0 0.0
    %702 = vmatmul.mubr.f32.gmra.mrb[0].mxu0 %v84
    %v703 = vpop.f32.mrb[0].mxu0
    %v704 = vadd.f32 %v625, %v703
    %v705 = vpop.f32.mrb[0].mxu0
    %706 = vmatprep.mubr.f32.mxu0 0.0
    %707 = vmatmul.mubr.f32.gmra.mrb[0].mxu0 %v85
    %v708 = vpop.f32.mrb[0].mxu0
    %v709 = vadd.f32 %v625, %v708
    %v710 = vpop.f32.mrb[0].mxu0
    %711 = vmatprep.mubr.f32.mxu0 0.0
    %712 = vmatmul.mubr.f32.gmra.mrb[0].mxu0 %v86
    %v713 = vpop.f32.mrb[0].mxu0
    %v714 = vadd.f32 %v625, %v713
    %v715 = vpop.f32.mrb[0].mxu0
    %716 = vmatprep.mubr.f32.mxu0 0.0
    %717 = vmatmul.mubr.f32.gmra.mrb[0].mxu0 %v87
    %v718 = vpop.f32.mrb[0].mxu0
    %v719 = vadd.f32 %v625, %v718
    %v720 = vpop.f32.mrb[0].mxu0
    %721 = vmatprep.mubr.f32.mxu0 0.0
    %722 = vmatmul.mubr.f32.gmra.mrb[0].mxu0 %v88
    %v723 = vpop.f32.mrb[0].mxu0
    %v724 = vadd.f32 %v625, %v723
    %v725 = vpop.f32.mrb[0].mxu0
    %726 = vmatprep.mubr.f32.mxu0 0.0
    %727 = vmatmul.mubr.f32.gmra.mrb[0].mxu0 %v89
    %v728 = vpop.f32.mrb[0].mxu0
    %v729 = vadd.f32 %v625, %v728
    %v730 = vpop.f32.mrb[0].mxu0
    %731 = vmatprep.mubr.f32.mxu0 0.0
    %732 = vmatmul.mubr.f32.gmra.mrb[0].mxu0 %v90
    %v733 = vpop.f32.mrb[0].mxu0
    %v734 = vadd.f32 %v625, %v733
    %v735 = vpop.f32.mrb[0].mxu0
    %736 = vmatprep.mubr.f32.mxu0 0.0
    %737 = vmatmul.mubr.f32.gmra.mrb[0].mxu0 %v91
    %v738 = vpop.f32.mrb[0].mxu0
    %v739 = vadd.f32 %v625, %v738
    %v740 = vpop.f32.mrb[0].mxu0
    %741 = vmatprep.mubr.f32.mxu0 0.0
    %742 = vmatmul.mubr.f32.gmra.mrb[0].mxu0 %v92
    %v743 = vpop.f32.mrb[0].mxu0
    %v744 = vadd.f32 %v625, %v743
    %v745 = vpop.f32.mrb[0].mxu0
    %746 = vmatprep.mubr.f32.mxu0 0.0
    %747 = vmatmul.mubr.f32.gmra.mrb[0].mxu0 %v93
    %v748 = vpop.f32.mrb[0].mxu0
    %v749 = vadd.f32 %v625, %v748
    %v750 = vpop.f32.mrb[0].mxu0
    %751 = vmatprep.mubr.f32.mxu0 0.0
    %752 = vmatmul.mubr.f32.gmra.mrb[0].mxu0 %v94
    %v753 = vpop.f32.mrb[0].mxu0
    %v754 = vadd.f32 %v625, %v753
    %v755 = vpop.f32.mrb[0].mxu0
    %756 = vmatprep.mubr.f32.mxu0 0.0
    %757 = vmatmul.mubr.f32.gmra.mrb[0].mxu0 %v95
    %v758 = vpop.f32.mrb[0].mxu0
    %v759 = vadd.f32 %v625, %v758
    %v760 = vpop.f32.mrb[0].mxu0
    %761 = vmatprep.mubr.f32.mxu0 0.0
    %762 = vmatmul.mubr.f32.gmra.mrb[0].mxu0 %v96
    %v763 = vpop.f32.mrb[0].mxu0
    %v764 = vadd.f32 %v625, %v763
    %v765 = vpop.f32.mrb[0].mxu0
    %766 = vmatprep.mubr.f32.mxu0 0.0
    %767 = vmatmul.mubr.f32.gmra.mrb[0].mxu0 %v97
    %v768 = vpop.f32.mrb[0].mxu0
    %v769 = vadd.f32 %v625, %v768
    %v770 = vpop.f32.mrb[0].mxu0
    %771 = vdwg.mxu0
    %772 = vst [vmem:[#allocation10] sm:$0xff] %v694
    %773 = vst [vmem:[#allocation10 + $0x8] sm:$0xff] %v699
    %774 = vst [vmem:[#allocation10 + $0x10] sm:$0xff] %v704
    %775 = vst [vmem:[#allocation10 + $0x18] sm:$0xff] %v709
    %776 = vst [vmem:[#allocation10 + $0x20] sm:$0xff] %v714
    %777 = vst [vmem:[#allocation10 + $0x28] sm:$0xff] %v719
    %778 = vst [vmem:[#allocation10 + $0x30] sm:$0xff] %v724
    %779 = vst [vmem:[#allocation10 + $0x38] sm:$0xff] %v729
    %780 = vst [vmem:[#allocation10 + $0x40] sm:$0xff] %v734
    %781 = vst [vmem:[#allocation10 + $0x48] sm:$0xff] %v739
    %782 = vst [vmem:[#allocation10 + $0x50] sm:$0xff] %v744
    %783 = vst [vmem:[#allocation10 + $0x58] sm:$0xff] %v749
    %784 = vst [vmem:[#allocation10 + $0x60] sm:$0xff] %v754
    %785 = vst [vmem:[#allocation10 + $0x68] sm:$0xff] %v759
    %786 = vst [vmem:[#allocation10 + $0x70] sm:$0xff] %v764
    %787 = vst [vmem:[#allocation10 + $0x78] sm:$0xff] %v769
    // Predicated region
    $region42: #{tpu_custom_call.1} parent=1 // pred_check
      _
    $region43: #{tpu_custom_call.1} parent=1 // pred_check_branch
      %789 = sbr.rel (0) target = $region45
    $region44: #{tpu_custom_call.1} parent=1 // pred_region
      %s791 = ssub.s32 2048, 2048
      %792 = vsyncadd [#allocation4], %s791
      %s793 = sshll.u32 [#allocation10], 4
      %s794 = int_to_ptr.vmem [resolvable:$true] %s793
      %799 = dma.vmem_to_hbm [thread:$0]  %s794, 2048, %s6, [#allocation4], 128, 128, 8
    $region45: #{tpu_custom_call.1} parent=1 // pred_fallthru
      _
    // Predicated region
    $region46: #{tpu_custom_call.1} parent=1 // pred_check
      _
    $region47: #{tpu_custom_call.1} parent=1 // pred_check_branch
      %801 = sbr.rel (0) target = $region49
    $region48: #{tpu_custom_call.1} parent=1 // pred_region
      %s803 = ssub.s32 2048, 2048
      %804 = vsyncadd [#allocation12], %s803
      %s805 = sshll.u32 [#allocation11], 4
      %s806 = int_to_ptr.vmem [resolvable:$true] %s805
      %811 = dma.vmem_to_hbm [thread:$0]  %s806, 2048, %s7, [#allocation12], 128, 128, 8
    $region49: #{tpu_custom_call.1} parent=1 // pred_fallthru
      _
    // Predicated region
    $region50: #{tpu_custom_call.1} parent=1 // pred_check
      _
    $region51: #{tpu_custom_call.1} parent=1 // pred_check_branch
      %813 = sbr.rel (0) target = $region53
    $region52: #{tpu_custom_call.1} parent=1 // pred_region
      %814 = dma.done [#allocation4], 2048
    $region53: #{tpu_custom_call.1} parent=1 // pred_fallthru
      _
    // Predicated region
    $region54: #{tpu_custom_call.1} parent=1 // pred_check
      _
    $region55: #{tpu_custom_call.1} parent=1 // pred_check_branch
      %816 = sbr.rel (0) target = $region57
    $region56: #{tpu_custom_call.1} parent=1 // pred_region
      %817 = dma.done [#allocation12], 2048
    $region57: #{tpu_custom_call.1} parent=1 // pred_fallthru
      _
    %818 = vsyncpa [#allocation3], 1
    %819 = vsyncpa [#allocation6], 1
    %820 = vsyncpa [#allocation9], 1
    %821 = vsyncpa [#allocation4], 1
    %822 = vsyncpa [#allocation12], 1

</llo_original>
